<compile_context>
chip_gen: v5e
topology: v5e:2x2
jax: 0.10.0
libtpu: 0.0.40
codegen_flags: <defaults>
</compile_context>

<pallas_src>
import jax
import jax.numpy as jnp
from jax.experimental import pallas as pl
from jax.experimental.pallas import tpu as pltpu

HIDDEN = 128
_ROW_ALIGN = 16  # bf16 packs 16 rows per vreg; keeps the cast relayout-free


# ----------------------------------------------------------------------------
# Kernel
# ----------------------------------------------------------------------------
def _net_kernel(x_ref, w1_ref, b1_ref, w2_ref, b2_ref, out_ref):
    # x tile: [tile_b, s_dim] f32 -> bf16 for the MXU (f32 accumulation).
    x = x_ref[...].astype(jnp.bfloat16)

    # Fused hidden layer: one [tile_b, s_dim] @ [s_dim, 2H] contraction.
    # h[:, :H] is the policy hidden state, h[:, H:] the value hidden state.
    # Bias-add + tanh in f32 (v5e-friendly elementwise path).
    h = jnp.tanh(
        jnp.dot(x, w1_ref[...], preferred_element_type=jnp.float32)
        + b1_ref[...]
    )

    # Fused block-diagonal heads -> one lane-dense [tile_b, 128] slab.
    y = (
        jnp.dot(h.astype(jnp.bfloat16), w2_ref[...],
                preferred_element_type=jnp.float32)
        + b2_ref[...]
    )
    # bf16 writeback halves the dominant HBM stream.
    out_ref[...] = y.astype(out_ref.dtype)


# ----------------------------------------------------------------------------
# Chip-aware configuration
# ----------------------------------------------------------------------------
def _chip_config():
    """Best-effort generation sniff; conservative defaults if it fails."""
    gen7 = False
    try:
        kind = jax.devices()[0].device_kind.lower()
        gen7 = ("v7" in kind) or ("7x" in kind)
    except Exception:
        pass
    if gen7:
        # 2 TCs / chip, 64 MiB physical VMEM -> stay under the 32 MiB scope.
        return {"num_cores": 2, "vmem_cap": 28 << 20, "tile_cap": 4096}
    # v5e / v6e / unknown: 1 TC, 128 MiB VMEM -> one big tile, higher clamp.
    return {"num_cores": 1, "vmem_cap": 64 << 20, "tile_cap": 8192}


def _choose_tiling(batch, num_cores, tile_cap, min_tiles=1):
    """Fewest balanced grid steps; tile rows aligned to 16; no empty tiles."""
    n_tiles = max(min_tiles, num_cores, pl.cdiv(batch, tile_cap))
    if num_cores > 1:
        n_tiles = pl.cdiv(n_tiles, num_cores) * num_cores
    tile_b = pl.cdiv(pl.cdiv(batch, n_tiles), _ROW_ALIGN) * _ROW_ALIGN
    n_tiles = pl.cdiv(batch, tile_b)  # drop tiles that became fully empty
    return tile_b, n_tiles


def _vmem_bytes(tile_b, s_dim, fused, cap):
    w1, b1, w2, b2 = fused["w1"], fused["b1"], fused["w2"], fused["b2"]
    per_tile = (
        2 * tile_b * s_dim * 4          # x f32 tile, double-buffered
        + 2 * tile_b * HIDDEN * 2       # bf16 output slab, double-buffered
        + tile_b * 2 * HIDDEN * 4       # f32 intermediate h (internal scratch)
        + tile_b * s_dim * 2            # bf16 cast of x
        + tile_b * 2 * HIDDEN * 2       # bf16 cast of h
    )
    weights = 2 * ((w1.size + w2.size) * 2 + (b1.size + b2.size) * 4)
    est = per_tile + weights
    return int(min(max(2 * est, 4 << 20), cap))


# ----------------------------------------------------------------------------
# Wrappers
# ----------------------------------------------------------------------------
def net_forward_slab(x, fused, *, min_tiles=1):
    """Preferred entry point: returns the fused bf16 output slab [B, 128].

    Columns [0, a_dim) are the policy logits, column a_dim is the value;
    consumers (softmax / loss) should slice this slab themselves so it never
    takes extra strided-HBM-read launches.  `min_tiles` is only for forcing a
    multi-tile grid (tests / explicit megacore splits).
    """
    B, s_dim = x.shape
    cfg = _chip_config()
    tile_b, n_tiles = _choose_tiling(B, cfg["num_cores"], cfg["tile_cap"],
                                     min_tiles=min_tiles)
    vmem = _vmem_bytes(tile_b, s_dim, fused, cfg["vmem_cap"])

    return pl.pallas_call(
        _net_kernel,
        out_shape=jax.ShapeDtypeStruct((B, HIDDEN), jnp.bfloat16),
        grid=(n_tiles,),
        in_specs=[
            pl.BlockSpec((tile_b, s_dim), lambda i: (i, 0)),        # x tile
            pl.BlockSpec((s_dim, 2 * HIDDEN), lambda i: (0, 0)),    # W1_cat
            pl.BlockSpec((1, 2 * HIDDEN), lambda i: (0, 0)),        # b1_cat
            pl.BlockSpec((2 * HIDDEN, HIDDEN), lambda i: (0, 0)),   # W2_blk
            pl.BlockSpec((1, HIDDEN), lambda i: (0, 0)),            # b2_blk
        ],
        out_specs=pl.BlockSpec((tile_b, HIDDEN), lambda i: (i, 0)),
        compiler_params=pltpu.CompilerParams(
            dimension_semantics=("parallel",),
            vmem_limit_bytes=vmem,
        ),
    )(x, fused["w1"], fused["b1"], fused["w2"], fused["b2"])


def net_forward(x, fused, *, min_tiles=1):
    """PyTorch-API-compatible wrapper: (logits [B, a_dim], values [B, 1]).

    Note: the two slices below are small extra launches; for best perf
    consume `net_forward_slab` directly in the downstream softmax / loss.
    Outputs are bf16 (acceptable for A3C action sampling).
    """
    slab = net_forward_slab(x, fused, min_tiles=min_tiles)
    a_dim = fused["a_dim"]
    return slab[:, :a_dim], slab[:, a_dim:a_dim + 1]


# ----------------------------------------------------------------------------
# Parameters (match PyTorch set_init: W ~ N(0, 0.1), b = 0.1; stored [in, out])
# ----------------------------------------------------------------------------
def init_params(key, s_dim, a_dim, hidden=HIDDEN):
    k1, k2, k3, k4 = jax.random.split(key, 4)
    std = 0.1
    return {
        "w_pi1": std * jax.random.normal(k1, (s_dim, hidden), jnp.float32),
        "b_pi1": jnp.full((1, hidden), 0.1, jnp.float32),
        "w_pi2": std * jax.random.normal(k2, (hidden, a_dim), jnp.float32),
        "b_pi2": jnp.full((1, a_dim), 0.1, jnp.float32),
        "w_v1": std * jax.random.normal(k3, (s_dim, hidden), jnp.float32),
        "b_v1": jnp.full((1, hidden), 0.1, jnp.float32),
        "w_v2": std * jax.random.normal(k4, (hidden, 1), jnp.float32),
        "b_v2": jnp.full((1, 1), 0.1, jnp.float32),
    }


def pack_params(p, hidden=HIDDEN):
    """Fuse per-layer params into the concatenated / block-diagonal layout."""
    a_dim = p["w_pi2"].shape[1]
    assert a_dim + 1 <= hidden, "fused head requires a_dim + 1 <= 128"

    # Fused first layer: [s_dim, 2H] (bf16 MXU operand), bias [1, 2H] (f32).
    w1 = jnp.concatenate([p["w_pi1"], p["w_v1"]], axis=1).astype(jnp.bfloat16)
    b1 = jnp.concatenate([p["b_pi1"], p["b_v1"]], axis=1)

    # Block-diagonal fused heads: [2H, H] slab.
    w2 = jnp.zeros((2 * hidden, hidden), jnp.float32)
    w2 = w2.at[:hidden, :a_dim].set(p["w_pi2"])
    w2 = w2.at[hidden:, a_dim:a_dim + 1].set(p["w_v2"])
    b2 = jnp.zeros((1, hidden), jnp.float32)
    b2 = b2.at[0, :a_dim].set(p["b_pi2"][0])
    b2 = b2.at[0, a_dim].set(p["b_v2"][0, 0])

    return {
        "w1": w1,
        "b1": b1,
        "w2": w2.astype(jnp.bfloat16),
        "b2": b2,
        "a_dim": a_dim,
    }


# ----------------------------------------------------------------------------
# References
# ----------------------------------------------------------------------------
def reference_forward_f32(x, p):
    """Exact semantics of the PyTorch module in f32."""
    pi1 = jnp.tanh(x @ p["w_pi1"] + p["b_pi1"])
    logits = pi1 @ p["w_pi2"] + p["b_pi2"]
    v1 = jnp.tanh(x @ p["w_v1"] + p["b_v1"])
    values = v1 @ p["w_v2"] + p["b_v2"]
    return logits, values


def reference_forward_bf16(x, p):
    """Same math with bf16 matmul operands / f32 acc / bf16 output (kernel-matched)."""
    bf = jnp.bfloat16

    def dot(a, b):
        return jnp.dot(a.astype(bf), b.astype(bf),
                       preferred_element_type=jnp.float32)

    pi1 = jnp.tanh(dot(x, p["w_pi1"]) + p["b_pi1"])
    logits = (dot(pi1, p["w_pi2"]) + p["b_pi2"]).astype(bf)
    v1 = jnp.tanh(dot(x, p["w_v1"]) + p["b_v1"])
    values = (dot(v1, p["w_v2"]) + p["b_v2"]).astype(bf)
    return logits, values


# ----------------------------------------------------------------------------
# Main
# ----------------------------------------------------------------------------
if __name__ == "__main__":
    key = jax.random.PRNGKey(0)
    k_params, k_x1, k_x2 = jax.random.split(key, 3)

    S_DIM, A_DIM = 32, 8
    params = init_params(k_params, S_DIM, A_DIM)
    fused = pack_params(params)

    # --- small batch (single partial tile; exercises masked ragged block) ---
    B_small = 6
    x_small = jax.random.normal(k_x1, (B_small, S_DIM), jnp.float32)
    logits, values = net_forward(x_small, fused)
    jax.block_until_ready((logits, values))

    assert logits.shape == (B_small, A_DIM) and values.shape == (B_small, 1)
    ref_l_bf, ref_v_bf = reference_forward_bf16(x_small, params)
    ref_l_f32, ref_v_f32 = reference_forward_f32(x_small, params)
    lf, vf = logits.astype(jnp.float32), values.astype(jnp.float32)
    assert jnp.allclose(lf, ref_l_bf.astype(jnp.float32), atol=2e-2, rtol=2e-2)
    assert jnp.allclose(vf, ref_v_bf.astype(jnp.float32), atol=2e-2, rtol=2e-2)
    assert jnp.allclose(lf, ref_l_f32, atol=5e-2, rtol=5e-2)
    assert jnp.allclose(vf, ref_v_f32, atol=5e-2, rtol=5e-2)

    # --- larger batch, default tiling (one big balanced tile on 1-TC chips) -
    B_big = 600
    x_big = jax.random.normal(k_x2, (B_big, S_DIM), jnp.float32)
    logits_b, values_b = net_forward(x_big, fused)
    jax.block_until_ready((logits_b, values_b))

    ref_lb, ref_vb = reference_forward_bf16(x_big, params)
    assert logits_b.shape == (B_big, A_DIM) and values_b.shape == (B_big, 1)
    assert jnp.allclose(logits_b.astype(jnp.float32),
                        ref_lb.astype(jnp.float32), atol=2e-2, rtol=2e-2)
    assert jnp.allclose(values_b.astype(jnp.float32),
                        ref_vb.astype(jnp.float32), atol=2e-2, rtol=2e-2)

    # --- forced multi-tile grid (balanced split + ragged final block) -------
    logits_m, values_m = net_forward(x_big, fused, min_tiles=2)
    jax.block_until_ready((logits_m, values_m))
    assert jnp.allclose(logits_m.astype(jnp.float32),
                        ref_lb.astype(jnp.float32), atol=2e-2, rtol=2e-2)
    assert jnp.allclose(values_m.astype(jnp.float32),
                        ref_vb.astype(jnp.float32), atol=2e-2, rtol=2e-2)

    print("KERNEL_OK")
</pallas_src>

<mosaic_0001>
module attributes {stable_mosaic.version = 11 : i64} {
  func.func @_net_kernel(%arg0: i32, %arg1: memref<16x32xf32, #tpu.memory_space<vmem>>, %arg2: memref<32x256xbf16, #tpu.memory_space<vmem>>, %arg3: memref<1x256xf32, #tpu.memory_space<vmem>>, %arg4: memref<256x128xbf16, #tpu.memory_space<vmem>>, %arg5: memref<1x128xf32, #tpu.memory_space<vmem>>, %arg6: memref<16x128xbf16, #tpu.memory_space<vmem>>) attributes {dimension_semantics = [#tpu.dimension_semantics<parallel>], iteration_bounds = array<i64: 1>, scalar_prefetch = 0 : i64, scratch_operands = 0 : i64, tpu.core_type = #tpu.core_type<tc>, window_params = [{transform_indices = @transform_0, window_bounds = array<i64: 16, 32>}, {pipeline_mode = #tpu.pipeline_mode<synchronous>, transform_indices = @transform_1, window_bounds = array<i64: 32, 256>}, {pipeline_mode = #tpu.pipeline_mode<synchronous>, transform_indices = @transform_2, window_bounds = array<i64: 1, 256>}, {pipeline_mode = #tpu.pipeline_mode<synchronous>, transform_indices = @transform_3, window_bounds = array<i64: 256, 128>}, {pipeline_mode = #tpu.pipeline_mode<synchronous>, transform_indices = @transform_4, window_bounds = array<i64: 1, 128>}, {transform_indices = @transform_5, window_bounds = array<i64: 16, 128>}]} {
    %c0 = arith.constant 0 : index
    %c0_0 = arith.constant 0 : index
    %0 = vector.load %arg1[%c0, %c0_0] : memref<16x32xf32, #tpu.memory_space<vmem>>, vector<16x32xf32>
    %1 = arith.truncf %0 : vector<16x32xf32> to vector<16x32xbf16>
    %c0_1 = arith.constant 0 : index
    %c0_2 = arith.constant 0 : index
    %2 = vector.load %arg2[%c0_1, %c0_2] : memref<32x256xbf16, #tpu.memory_space<vmem>>, vector<32x256xbf16>
    %cst = arith.constant dense<0.000000e+00> : vector<16x256xf32>
    %3 = tpu.matmul %1, %2, %cst {dimension_numbers = #tpu.dot_dimension_numbers<[1], [0], [0], [1], [0, 0, 1, 1], [], []>} : vector<16x32xbf16>, vector<32x256xbf16>, vector<16x256xf32> -> vector<16x256xf32>
    %c0_3 = arith.constant 0 : index
    %c0_4 = arith.constant 0 : index
    %4 = vector.load %arg3[%c0_3, %c0_4] : memref<1x256xf32, #tpu.memory_space<vmem>>, vector<1x256xf32>
    %5 = vector.broadcast %4 : vector<1x256xf32> to vector<16x256xf32>
    %6 = arith.addf %3, %5 : vector<16x256xf32>
    %7 = math.tanh %6 : vector<16x256xf32>
    %8 = arith.truncf %7 : vector<16x256xf32> to vector<16x256xbf16>
    %c0_5 = arith.constant 0 : index
    %c0_6 = arith.constant 0 : index
    %9 = vector.load %arg4[%c0_5, %c0_6] : memref<256x128xbf16, #tpu.memory_space<vmem>>, vector<256x128xbf16>
    %cst_7 = arith.constant dense<0.000000e+00> : vector<16x128xf32>
    %10 = tpu.matmul %8, %9, %cst_7 {dimension_numbers = #tpu.dot_dimension_numbers<[1], [0], [0], [1], [0, 0, 1, 1], [], []>} : vector<16x256xbf16>, vector<256x128xbf16>, vector<16x128xf32> -> vector<16x128xf32>
    %c0_8 = arith.constant 0 : index
    %c0_9 = arith.constant 0 : index
    %11 = vector.load %arg5[%c0_8, %c0_9] : memref<1x128xf32, #tpu.memory_space<vmem>>, vector<1x128xf32>
    %12 = vector.broadcast %11 : vector<1x128xf32> to vector<16x128xf32>
    %13 = arith.addf %10, %12 : vector<16x128xf32>
    %14 = arith.truncf %13 : vector<16x128xf32> to vector<16x128xbf16>
    %c0_10 = arith.constant 0 : index
    %c0_11 = arith.constant 0 : index
    %15 = vector.load %arg6[%c0_10, %c0_11] : memref<16x128xbf16, #tpu.memory_space<vmem>>, vector<16x128xbf16>
    tpu.vector_store %arg6[%c0_10, %c0_11], %14 {strides = array<i32>} : memref<16x128xbf16, #tpu.memory_space<vmem>>, vector<16x128xbf16>,
    return
  }
  func.func @transform_0(%arg0: i32) -> (i32, i32) {
    %c0_i32 = arith.constant 0 : i32
    %c0_i32_0 = arith.constant 0 : i32
    return %arg0, %c0_i32 : i32, i32
  }
  func.func @transform_1(%arg0: i32) -> (i32, i32) {
    %c0_i32 = arith.constant 0 : i32
    %c0_i32_0 = arith.constant 0 : i32
    %c0_i32_1 = arith.constant 0 : i32
    return %c0_i32, %c0_i32_0 : i32, i32
  }
  func.func @transform_2(%arg0: i32) -> (i32, i32) {
    %c0_i32 = arith.constant 0 : i32
    %c0_i32_0 = arith.constant 0 : i32
    %c0_i32_1 = arith.constant 0 : i32
    return %c0_i32, %c0_i32_0 : i32, i32
  }
  func.func @transform_3(%arg0: i32) -> (i32, i32) {
    %c0_i32 = arith.constant 0 : i32
    %c0_i32_0 = arith.constant 0 : i32
    %c0_i32_1 = arith.constant 0 : i32
    return %c0_i32, %c0_i32_0 : i32, i32
  }
  func.func @transform_4(%arg0: i32) -> (i32, i32) {
    %c0_i32 = arith.constant 0 : i32
    %c0_i32_0 = arith.constant 0 : i32
    %c0_i32_1 = arith.constant 0 : i32
    return %c0_i32, %c0_i32_0 : i32, i32
  }
  func.func @transform_5(%arg0: i32) -> (i32, i32) {
    %c0_i32 = arith.constant 0 : i32
    %c0_i32_0 = arith.constant 0 : i32
    return %arg0, %c0_i32 : i32, i32
  }
}

</mosaic_0001>

<llo_original>
// kernel: tpu_custom_call.1
$region0: #{tpu_custom_call.1}
  #allocation0 [shape = 'u32[]', space=smem, size = 0x4, offset = 0x4, fixed_abs, tag = 'smem constant byte address 0x4 - core index']
  #allocation1 [shape = 'u32[72,128]{1,0:T(1,128)}', space=vmem, size = 0x9000, scoped, tag = 'internal scratch']
  %s0 = inlined_call_operand.hbm [shape: f32[6,32], index: 0, kind: input, shape index: {}]
  %s1 = inlined_call_operand.hbm [shape: bf16[32,256], index: 1, kind: input, shape index: {}]
  %s2 = inlined_call_operand.hbm [shape: f32[1,256], index: 2, kind: input, shape index: {}]
  %s3 = inlined_call_operand.hbm [shape: bf16[256,128], index: 3, kind: input, shape index: {}]
  %s4 = inlined_call_operand.vmem [shape: f32[1,128], index: 4, kind: input, shape index: {}]
  %s5 = inlined_call_operand.hbm [shape: bf16[6,128], index: 5, kind: output, shape index: {}]
  %s6 = sld [smem:[#allocation0]]
  $region46: #{tpu_custom_call.1} parent=0
    _
  %s8 = ssub.s32 1, %s6
  %s9 = scalar_select 0, %s8, %s6
  $region1: #{tpu_custom_call.1} parent=0
    #allocation2 [shape = 'u8[8192]{0}', space=vmem, size = 0x2000, scoped, tag = 'input window, operand 0, single buffered']
    #allocation3 [shape = 's32[1]{0}', space=sflag, size = 0x4, scoped, tag = 'scoped memory for tpu_custom_call.1']
    #allocation4 [shape = 's32[1]{0}', space=sflag, size = 0x4, scoped, tag = 'scoped memory for tpu_custom_call.1']
    #allocation5 [shape = 'u8[16384]{0}', space=vmem, size = 0x4000, scoped, tag = 'input window, operand 1, single buffered']
    #allocation6 [shape = 's32[1]{0}', space=sflag, size = 0x4, scoped, tag = 'scoped memory for tpu_custom_call.1']
    #allocation7 [shape = 'u8[1024]{0}', space=vmem, size = 0x400, scoped, tag = 'input window, operand 2, single buffered']
    #allocation8 [shape = 'u8[65536]{0}', space=vmem, size = 0x10000, scoped, tag = 'input window, operand 3, single buffered']
    #allocation9 [shape = 's32[1]{0}', space=sflag, size = 0x4, scoped, tag = 'scoped memory for tpu_custom_call.1']
    #allocation10 [shape = 'u8[4096]{0}', space=vmem, size = 0x1000, scoped, tag = 'output window, operand 0, single buffered']
    %10 = vsyncpa [#allocation3], 0
    %11 = vsyncpa [#allocation6], 0
    %12 = vsyncpa [#allocation9], 0
    %13 = vsyncpa [#allocation4], 0
    // Predicated region
    $region2: #{tpu_custom_call.1} parent=1 // pred_check
      _
    $region3: #{tpu_custom_call.1} parent=1 // pred_check_branch
      %15 = sbr.rel (0) target = $region5
    $region4: #{tpu_custom_call.1} parent=1 // pred_region
      %17 = vsyncadd [#allocation3], 128
      %s18 = sshll.u32 %s0, 4
      %s19 = int_to_ptr.hbm [resolvable:$true] %s18
      %s20 = sshll.u32 [#allocation2], 4
      %s21 = int_to_ptr.vmem [resolvable:$true] %s20
      %26 = dma.hbm_to_vmem [thread:$0]  %s19, 128, %s21, [#allocation3], 128, 128, 8
    $region5: #{tpu_custom_call.1} parent=1 // pred_fallthru
      _
    // Predicated region
    $region6: #{tpu_custom_call.1} parent=1 // pred_check
      _
    $region7: #{tpu_custom_call.1} parent=1 // pred_check_branch
      %28 = sbr.rel (0) target = $region9
    $region8: #{tpu_custom_call.1} parent=1 // pred_region
      %30 = vsyncadd [#allocation6], 0
      %s31 = sshll.u32 %s1, 4
      %s32 = int_to_ptr.hbm [resolvable:$true] %s31
      %s33 = sshll.u32 [#allocation5], 4
      %s34 = int_to_ptr.vmem [resolvable:$true] %s33
      %39 = dma.hbm_to_vmem [thread:$0]  %s32, 512, %s34, [#allocation6], 128, 128, 8
    $region9: #{tpu_custom_call.1} parent=1 // pred_fallthru
      _
    // Predicated region
    $region10: #{tpu_custom_call.1} parent=1 // pred_check
      _
    $region11: #{tpu_custom_call.1} parent=1 // pred_check_branch
      %41 = sbr.rel (0) target = $region13
    $region12: #{tpu_custom_call.1} parent=1 // pred_region
      %43 = vsyncadd [#allocation6], 0
      %s45 = sshll.u32 %s2, 4
      %s46 = int_to_ptr.hbm [resolvable:$true] %s45
      %s47 = sshll.u32 [#allocation7], 4
      %s48 = int_to_ptr.vmem [resolvable:$true] %s47
      %50 = dma.hbm_to_vmem [thread:$0]  %s46, 32, %s48, [#allocation6]
    $region13: #{tpu_custom_call.1} parent=1 // pred_fallthru
      _
    // Predicated region
    $region14: #{tpu_custom_call.1} parent=1 // pred_check
      _
    $region15: #{tpu_custom_call.1} parent=1 // pred_check_branch
      %52 = sbr.rel (0) target = $region17
    $region16: #{tpu_custom_call.1} parent=1 // pred_region
      %54 = vsyncadd [#allocation9], 0
      %s55 = sshll.u32 %s3, 4
      %s56 = int_to_ptr.hbm [resolvable:$true] %s55
      %s57 = sshll.u32 [#allocation8], 4
      %s58 = int_to_ptr.vmem [resolvable:$true] %s57
      %63 = dma.hbm_to_vmem [thread:$0]  %s56, 2048, %s58, [#allocation9], 64, 64, 4
    $region17: #{tpu_custom_call.1} parent=1 // pred_fallthru
      _
    // Predicated region
    $region18: #{tpu_custom_call.1} parent=1 // pred_check
      _
    $region19: #{tpu_custom_call.1} parent=1 // pred_check_branch
      %65 = sbr.rel (0) target = $region21
    $region20: #{tpu_custom_call.1} parent=1 // pred_region
      _
    $region21: #{tpu_custom_call.1} parent=1 // pred_fallthru
      _
    // Predicated region
    $region22: #{tpu_custom_call.1} parent=1 // pred_check
      _
    $region23: #{tpu_custom_call.1} parent=1 // pred_check_branch
      %67 = sbr.rel (0) target = $region25
    $region24: #{tpu_custom_call.1} parent=1 // pred_region
      %69 = dma.done [#allocation3], 256
    $region25: #{tpu_custom_call.1} parent=1 // pred_fallthru
      _
    // Predicated region
    $region26: #{tpu_custom_call.1} parent=1 // pred_check
      _
    $region27: #{tpu_custom_call.1} parent=1 // pred_check_branch
      %71 = sbr.rel (0) target = $region29
    $region28: #{tpu_custom_call.1} parent=1 // pred_region
      %73 = dma.done [#allocation6], 512
    $region29: #{tpu_custom_call.1} parent=1 // pred_fallthru
      _
    // Predicated region
    $region30: #{tpu_custom_call.1} parent=1 // pred_check
      _
    $region31: #{tpu_custom_call.1} parent=1 // pred_check_branch
      %75 = sbr.rel (0) target = $region33
    $region32: #{tpu_custom_call.1} parent=1 // pred_region
      %77 = dma.done [#allocation6], 32
    $region33: #{tpu_custom_call.1} parent=1 // pred_fallthru
      _
    // Predicated region
    $region34: #{tpu_custom_call.1} parent=1 // pred_check
      _
    $region35: #{tpu_custom_call.1} parent=1 // pred_check_branch
      %79 = sbr.rel (0) target = $region37
    $region36: #{tpu_custom_call.1} parent=1 // pred_region
      %81 = dma.done [#allocation9], 2048
    $region37: #{tpu_custom_call.1} parent=1 // pred_fallthru
      _
    %v83 = vld [vmem:[#allocation2] sm:$0xff]
    %v84 = vld [vmem:[#allocation2 + $0x8] sm:$0xff]
    %v85 = vpack.c.bf16 %v84, %v83
    %v86 = vld [vmem:[#allocation5] sm:$0xff]
    %v87 = vld [vmem:[#allocation5 + $0x8] sm:$0xff]
    %v88 = vld [vmem:[#allocation5 + $0x10] sm:$0xff]
    %v89 = vld [vmem:[#allocation5 + $0x18] sm:$0xff]
    %v90 = vld [vmem:[#allocation7] sm:$0x3]
    %v92 = vperm.slane %v90, 0
    %v93 = vperm.slane %v90, 1
    %v100 = vunpack.c.l.b16 %v86
    %v101 = vunpack.c.h.b16 %v86
    %v102 = vunpack.c.l.b16 %v87
    %v103 = vunpack.c.h.b16 %v87
    %v104 = vunpack.c.l.b16 %v88
    %v105 = vunpack.c.h.b16 %v88
    %v106 = vunpack.c.l.b16 %v89
    %v107 = vunpack.c.h.b16 %v89
    %v108 = vpack.c.b16 %v102, %v100
    %v109 = vpack.c.b16 %v103, %v101
    %v110 = vpack.c.b16 %v106, %v104
    %v111 = vpack.c.b16 %v107, %v105
    %vm116 = vcmask 261120
    %v118 = vsel %vm116, %v85, 0
    %120 = vmatpush.bf16.msra.mxu0 0
    %121 = vmatpush.bf16.msra.mxu0 0
    %122 = vmatpush.bf16.msra.mxu0 0
    %123 = vmatpush.bf16.msra.mxu0 0
    %124 = vmatpush.bf16.msra.mxu0 0
    %125 = vmatpush.bf16.msra.mxu0 0
    %126 = vmatpush.bf16.msra.mxu0 %v110
    %127 = vmatpush.bf16.msra.mxu0 %v108
    %128 = vmatmul.bf16.gmra.mxu0 %v118
    %v129 = vpop.f32.mrf.mxu0
    %v130 = vadd.f32 %v92, %v129
    %v131 = vpop.f32.mrf.mxu0
    %v132 = vadd.f32 %v92, %v131
    %133 = vdwg.mxu0
    %134 = vmatpush.bf16.msra.mxu0 0
    %135 = vmatpush.bf16.msra.mxu0 0
    %136 = vmatpush.bf16.msra.mxu0 0
    %137 = vmatpush.bf16.msra.mxu0 0
    %138 = vmatpush.bf16.msra.mxu0 0
    %139 = vmatpush.bf16.msra.mxu0 0
    %140 = vmatpush.bf16.msra.mxu0 %v111
    %141 = vmatpush.bf16.msra.mxu0 %v109
    %142 = vmatmul.bf16.gmra.mxu0 %v118
    %v143 = vpop.f32.mrf.mxu0
    %v144 = vadd.f32 %v93, %v143
    %v145 = vpop.f32.mrf.mxu0
    %v146 = vadd.f32 %v93, %v145
    %147 = vdwg.mxu0
    %v148 = vtanh.pop %v130
    %v149 = vtanh.pop %v144
    %v150 = vtanh.pop %v132
    %v151 = vtanh.pop %v146
    %v152 = vpack.c.bf16 %v150, %v148
    %v153 = vpack.c.bf16 %v151, %v149
    %v154 = vld [vmem:[#allocation8] sm:$0xf]
    %v155 = vld [vmem:[#allocation8 + $0x4] sm:$0xf]
    %v156 = vld [vmem:[#allocation8 + $0x8] sm:$0xf]
    %v157 = vld [vmem:[#allocation8 + $0xc] sm:$0xf]
    %v158 = vld [vmem:[#allocation8 + $0x10] sm:$0xf]
    %v159 = vld [vmem:[#allocation8 + $0x14] sm:$0xf]
    %v160 = vld [vmem:[#allocation8 + $0x18] sm:$0xf]
    %v161 = vld [vmem:[#allocation8 + $0x1c] sm:$0xf]
    %v162 = vld [vmem:[#allocation8 + $0x20] sm:$0xf]
    %v163 = vld [vmem:[#allocation8 + $0x24] sm:$0xf]
    %v164 = vld [vmem:[#allocation8 + $0x28] sm:$0xf]
    %v165 = vld [vmem:[#allocation8 + $0x2c] sm:$0xf]
    %v166 = vld [vmem:[#allocation8 + $0x30] sm:$0xf]
    %v167 = vld [vmem:[#allocation8 + $0x34] sm:$0xf]
    %v168 = vld [vmem:[#allocation8 + $0x38] sm:$0xf]
    %v169 = vld [vmem:[#allocation8 + $0x3c] sm:$0xf]
    %v170 = vld [vmem:[#allocation8 + $0x40] sm:$0xf]
    %v171 = vld [vmem:[#allocation8 + $0x44] sm:$0xf]
    %v172 = vld [vmem:[#allocation8 + $0x48] sm:$0xf]
    %v173 = vld [vmem:[#allocation8 + $0x4c] sm:$0xf]
    %v174 = vld [vmem:[#allocation8 + $0x50] sm:$0xf]
    %v175 = vld [vmem:[#allocation8 + $0x54] sm:$0xf]
    %v176 = vld [vmem:[#allocation8 + $0x58] sm:$0xf]
    %v177 = vld [vmem:[#allocation8 + $0x5c] sm:$0xf]
    %v178 = vld [vmem:[#allocation8 + $0x60] sm:$0xf]
    %v179 = vld [vmem:[#allocation8 + $0x64] sm:$0xf]
    %v180 = vld [vmem:[#allocation8 + $0x68] sm:$0xf]
    %v181 = vld [vmem:[#allocation8 + $0x6c] sm:$0xf]
    %v182 = vld [vmem:[#allocation8 + $0x70] sm:$0xf]
    %v183 = vld [vmem:[#allocation8 + $0x74] sm:$0xf]
    %v184 = vld [vmem:[#allocation8 + $0x78] sm:$0xf]
    %v185 = vld [vmem:[#allocation8 + $0x7c] sm:$0xf]
    %v186 = vld [vmem:[%s4] sm:$0x1]
    %v188 = vperm.slane %v186, 0
    %v222 = vunpack.c.l.b16 %v154
    %v223 = vunpack.c.l.b16 %v155
    %v224 = vunpack.c.l.b16 %v156
    %v225 = vunpack.c.l.b16 %v157
    %v226 = vunpack.c.l.b16 %v158
    %v227 = vunpack.c.l.b16 %v159
    %v228 = vunpack.c.l.b16 %v160
    %v229 = vunpack.c.l.b16 %v161
    %v230 = vunpack.c.l.b16 %v162
    %v231 = vunpack.c.l.b16 %v163
    %v232 = vunpack.c.l.b16 %v164
    %v233 = vunpack.c.l.b16 %v165
    %v234 = vunpack.c.l.b16 %v166
    %v235 = vunpack.c.l.b16 %v167
    %v236 = vunpack.c.l.b16 %v168
    %v237 = vunpack.c.l.b16 %v169
    %v238 = vunpack.c.l.b16 %v170
    %v239 = vunpack.c.l.b16 %v171
    %v240 = vunpack.c.l.b16 %v172
    %v241 = vunpack.c.l.b16 %v173
    %v242 = vunpack.c.l.b16 %v174
    %v243 = vunpack.c.l.b16 %v175
    %v244 = vunpack.c.l.b16 %v176
    %v245 = vunpack.c.l.b16 %v177
    %v246 = vunpack.c.l.b16 %v178
    %v247 = vunpack.c.l.b16 %v179
    %v248 = vunpack.c.l.b16 %v180
    %v249 = vunpack.c.l.b16 %v181
    %v250 = vunpack.c.l.b16 %v182
    %v251 = vunpack.c.l.b16 %v183
    %v252 = vunpack.c.l.b16 %v184
    %v253 = vunpack.c.l.b16 %v185
    %v254 = vpack.c.b16 %v223, %v222
    %v255 = vpack.c.b16 %v225, %v224
    %v256 = vpack.c.b16 %v227, %v226
    %v257 = vpack.c.b16 %v229, %v228
    %v258 = vpack.c.b16 %v231, %v230
    %v259 = vpack.c.b16 %v233, %v232
    %v260 = vpack.c.b16 %v235, %v234
    %v261 = vpack.c.b16 %v237, %v236
    %v262 = vpack.c.b16 %v239, %v238
    %v263 = vpack.c.b16 %v241, %v240
    %v264 = vpack.c.b16 %v243, %v242
    %v265 = vpack.c.b16 %v245, %v244
    %v266 = vpack.c.b16 %v247, %v246
    %v267 = vpack.c.b16 %v249, %v248
    %v268 = vpack.c.b16 %v251, %v250
    %v269 = vpack.c.b16 %v253, %v252
    %286 = vmatpush.bf16.msra.mxu0 %v261
    %287 = vmatpush.bf16.msra.mxu0 %v260
    %288 = vmatpush.bf16.msra.mxu0 %v259
    %289 = vmatpush.bf16.msra.mxu0 %v258
    %290 = vmatpush.bf16.msra.mxu0 %v257
    %291 = vmatpush.bf16.msra.mxu0 %v256
    %292 = vmatpush.bf16.msra.mxu0 %v255
    %293 = vmatpush.bf16.msra.mxu0 %v254
    %294 = vmatmul.bf16.gmra.mxu0 %v152
    %v295 = vpop.f32.mrf.mxu0
    %v296 = vadd.f32 %v188, %v295
    %v297 = vpop.f32.mrf.mxu0
    %v298 = vadd.f32 %v188, %v297
    %299 = vdwg.mxu0
    %300 = vmatpush.bf16.msra.mxu0 %v269
    %301 = vmatpush.bf16.msra.mxu0 %v268
    %302 = vmatpush.bf16.msra.mxu0 %v267
    %303 = vmatpush.bf16.msra.mxu0 %v266
    %304 = vmatpush.bf16.msra.mxu0 %v265
    %305 = vmatpush.bf16.msra.mxu0 %v264
    %306 = vmatpush.bf16.msra.mxu0 %v263
    %307 = vmatpush.bf16.msra.mxu0 %v262
    %308 = vmatmul.bf16.gmra.mxu0 %v153
    %v309 = vpop.f32.mrf.mxu0
    %v310 = vadd.f32 %v296, %v309
    %v311 = vpop.f32.mrf.mxu0
    %v312 = vadd.f32 %v298, %v311
    %313 = vdwg.mxu0
    %v314 = vpack.c.bf16 %v310, %v310
    %v315 = vpack.c.bf16 %v312, %v312
    %316 = vst [vmem:[#allocation10] sm:$0xf] %v314
    %317 = vst [vmem:[#allocation10 + $0x4] sm:$0xf] %v315
    // Predicated region
    $region38: #{tpu_custom_call.1} parent=1 // pred_check
      _
    $region39: #{tpu_custom_call.1} parent=1 // pred_check_branch
      %319 = sbr.rel (0) target = $region41
    $region40: #{tpu_custom_call.1} parent=1 // pred_region
      %321 = vsyncadd [#allocation4], 64
      %s322 = sshll.u32 [#allocation10], 4
      %s323 = int_to_ptr.vmem [resolvable:$true] %s322
      %s324 = sshll.u32 %s5, 4
      %s325 = int_to_ptr.hbm [resolvable:$true] %s324
      %330 = dma.vmem_to_hbm [thread:$0]  %s323, 64, %s325, [#allocation4], 64, 64, 4
    $region41: #{tpu_custom_call.1} parent=1 // pred_fallthru
      _
    // Predicated region
    $region42: #{tpu_custom_call.1} parent=1 // pred_check
      _
    $region43: #{tpu_custom_call.1} parent=1 // pred_check_branch
      %332 = sbr.rel (0) target = $region45
    $region44: #{tpu_custom_call.1} parent=1 // pred_region
      %334 = dma.done [#allocation4], 128
    $region45: #{tpu_custom_call.1} parent=1 // pred_fallthru
      _
    %335 = vsyncpa [#allocation3], 1
    %336 = vsyncpa [#allocation6], 1
    %337 = vsyncpa [#allocation9], 1
    %338 = vsyncpa [#allocation4], 1

</llo_original>
